<compile_context>
chip_gen: v7x
topology: tpu7x:2x2x1
jax: 0.10.0
libtpu: 0.0.40
codegen_flags: <defaults>
</compile_context>

<pallas_src>
import numpy as np
import jax
import jax.numpy as jnp
from jax import lax
from jax.experimental import pallas as pl
from jax.experimental.pallas import tpu as pltpu


def _theta_base(E):
    """theta_type 'a': 10000 ** (-2/E * arange(E//2)), float32, shape (E//2,)."""
    return (10000.0 ** (-2.0 / E * np.arange(E // 2, dtype=np.float32))
            ).astype(np.float32)


def _round_up(a, b):
    return (a + b - 1) // b * b


def lrpe_kernel(x_ref, v_ref, theta_ref, o_ref):
    TL, E = x_ref.shape
    x = x_ref[...].astype(jnp.float32)            # (TL, E)
    v = v_ref[...].astype(jnp.float32)            # (1, E)

    # Householder reflection: x - 2 (x . v) v
    proj = jnp.sum(x * v, axis=-1, keepdims=True)  # (TL, 1), XLU lane reduce
    xh = x - 2.0 * proj * v                        # (TL, E)

    # Angles generated in-kernel (EUP).  theta_ref has the pair sign folded
    # in: [+t0, -t0, +t1, -t1, ...]; sin is odd so sin(ang) carries the sign,
    # cos is even so cos(ang) is unaffected.
    l_idx = pl.program_id(1)
    row = lax.broadcasted_iota(jnp.int32, (TL, E), 0) + l_idx * TL
    ang = row.astype(jnp.float32) * theta_ref[...]  # (TL, E)
    c = jnp.cos(ang)
    s = jnp.sin(ang)                                # sign-folded sin

    # Adjacent-pair swap via XLU lane rotations + parity select.
    #   t[2i]   =  xh[2i]   * sin_i
    #   t[2i+1] = -xh[2i+1] * sin_i
    # out[2i]   needs t[2i+1]  -> neighbour on the right  -> roll by E-1
    # out[2i+1] needs t[2i]    -> neighbour on the left   -> roll by 1
    t = xh * s
    lane = lax.broadcasted_iota(jnp.int32, (TL, E), 1)
    is_even = (lane & 1) == 0
    swapped = jnp.where(is_even,
                        pltpu.roll(t, E - 1, axis=1),   # value from lane j+1
                        pltpu.roll(t, 1, axis=1))       # value from lane j-1

    o_ref[...] = (xh * c + swapped).astype(o_ref.dtype)


def lrpe_forward(x, v, *, target_tile_bytes=2 * 1024 * 1024):
    B, L, E = x.shape
    assert E % 2 == 0, "even embedding dim required"
    # TODO(synk): odd embedding dim (rope passes the last channel through) not handled.

    dtype_bytes = jnp.dtype(x.dtype).itemsize
    E_pad = _round_up(E, 128)                     # lane-dense loads/stores
    max_rows = max(8, (target_tile_bytes // (E_pad * dtype_bytes)) // 8 * 8)
    TL = min(_round_up(L, 8), max_rows)           # rows per tile, multiple of 8
    L_pad = _round_up(L, TL)

    x_p = x
    if (L_pad, E_pad) != (L, E):
        x_p = jnp.zeros((B, L_pad, E_pad), x.dtype).at[:, :L, :E].set(x)

    v_p = jnp.zeros((1, E_pad), jnp.float32).at[0, :E].set(v.astype(jnp.float32))

    th = _theta_base(E)                            # (E//2,)
    theta_signed = np.zeros((1, E_pad), np.float32)
    theta_signed[0, 0:E:2] = th
    theta_signed[0, 1:E:2] = -th
    theta_signed = jnp.asarray(theta_signed)

    grid = (B, L_pad // TL)
    out = pl.pallas_call(
        lrpe_kernel,
        out_shape=jax.ShapeDtypeStruct((B, L_pad, E_pad), x.dtype),
        grid=grid,
        in_specs=[
            pl.BlockSpec((None, TL, E_pad), lambda b, l: (b, l, 0)),  # x (batch squeezed)
            pl.BlockSpec((1, E_pad), lambda b, l: (0, 0)),            # v
            pl.BlockSpec((1, E_pad), lambda b, l: (0, 0)),            # signed theta
        ],
        out_specs=pl.BlockSpec((None, TL, E_pad), lambda b, l: (b, l, 0)),
        compiler_params=pltpu.CompilerParams(
            dimension_semantics=("parallel", "parallel"),
            vmem_limit_bytes=32 * 1024 * 1024),
    )(x_p, v_p, theta_signed)

    if (L_pad, E_pad) != (L, E):
        out = out[:, :L, :E]
    return out


def lrpe_reference(x, v):
    """Pure-JAX reference matching the PyTorch module semantics."""
    B, L, E = x.shape
    proj = jnp.sum(x * v[None, None, :], axis=-1, keepdims=True)
    xh = x - 2.0 * proj * v[None, None, :]
    th = jnp.asarray(_theta_base(E))
    theta = jnp.stack([th, th], axis=-1).reshape(E)
    ang = theta[None, :] * jnp.arange(L, dtype=jnp.float32)[:, None]
    x_half = jnp.stack([-xh[..., 1::2], xh[..., ::2]], axis=-1).reshape(B, L, E)
    return xh * jnp.cos(ang)[None] + x_half * jnp.sin(ang)[None]


if __name__ == "__main__":
    B, L, E = 2, 8, 32
    key = jax.random.PRNGKey(0)
    kx, kv = jax.random.split(key)
    x = jax.random.normal(kx, (B, L, E), dtype=jnp.float32)
    # Householder vector parameter: deterministic, unit-normalized (as in __init__).
    v = jax.random.normal(kv, (E,), dtype=jnp.float32)
    v = v / jnp.linalg.norm(v)

    out = jax.block_until_ready(lrpe_forward(x, v))
    ref = lrpe_reference(x, v)
    np.testing.assert_allclose(np.asarray(out), np.asarray(ref),
                               rtol=1e-5, atol=2e-5)
    print("KERNEL_OK")
</pallas_src>

<mosaic_0001>
module attributes {stable_mosaic.version = 11 : i64} {
  func.func @lrpe_kernel(%arg0: i32, %arg1: i32, %arg2: memref<1x8x128xf32, #tpu.memory_space<vmem>>, %arg3: memref<1x128xf32, #tpu.memory_space<vmem>>, %arg4: memref<1x128xf32, #tpu.memory_space<vmem>>, %arg5: memref<1x8x128xf32, #tpu.memory_space<vmem>>) attributes {dimension_semantics = [#tpu.dimension_semantics<parallel>, #tpu.dimension_semantics<parallel>], iteration_bounds = array<i64: 2, 1>, scalar_prefetch = 0 : i64, scratch_operands = 0 : i64, tpu.core_type = #tpu.core_type<tc>, window_params = [{transform_indices = @transform_0, window_bounds = array<i64: 1, 8, 128>}, {pipeline_mode = #tpu.pipeline_mode<synchronous>, transform_indices = @transform_1, window_bounds = array<i64: 1, 128>}, {pipeline_mode = #tpu.pipeline_mode<synchronous>, transform_indices = @transform_2, window_bounds = array<i64: 1, 128>}, {transform_indices = @transform_3, window_bounds = array<i64: 1, 8, 128>}]} {
    %c0 = arith.constant 0 : index
    %c0_0 = arith.constant 0 : index
    %c0_1 = arith.constant 0 : index
    %0 = vector.load %arg2[%c0, %c0_0, %c0_1] : memref<1x8x128xf32, #tpu.memory_space<vmem>>, vector<1x8x128xf32>
    %1 = vector.shape_cast %0 : vector<1x8x128xf32> to vector<8x128xf32>
    %c0_2 = arith.constant 0 : index
    %c0_3 = arith.constant 0 : index
    %2 = vector.load %arg3[%c0_2, %c0_3] : memref<1x128xf32, #tpu.memory_space<vmem>>, vector<1x128xf32>
    %3 = vector.broadcast %2 : vector<1x128xf32> to vector<8x128xf32>
    %4 = arith.mulf %1, %3 : vector<8x128xf32>
    %cst = arith.constant dense<0.000000e+00> : vector<8xf32>
    %5 = vector.multi_reduction <add>, %4, %cst [1] : vector<8x128xf32> to vector<8xf32>
    %6 = vector.shape_cast %5 : vector<8xf32> to vector<8x1xf32>
    %cst_4 = arith.constant 2.000000e+00 : f32
    %7 = vector.broadcast %cst_4 : f32 to vector<8x1xf32>
    %8 = arith.mulf %7, %6 : vector<8x1xf32>
    %9 = vector.broadcast %8 : vector<8x1xf32> to vector<8x128xf32>
    %10 = vector.broadcast %2 : vector<1x128xf32> to vector<8x128xf32>
    %11 = arith.mulf %9, %10 : vector<8x128xf32>
    %12 = arith.subf %1, %11 : vector<8x128xf32>
    %13 = tpu.iota {dimensions = array<i32: 0>} : vector<8x128xi32>
    %c8_i32 = arith.constant 8 : i32
    %14 = arith.muli %arg1, %c8_i32 : i32
    %15 = vector.broadcast %14 : i32 to vector<8x128xi32>
    %16 = arith.addi %13, %15 : vector<8x128xi32>
    %17 = arith.sitofp %16 : vector<8x128xi32> to vector<8x128xf32>
    %c0_5 = arith.constant 0 : index
    %c0_6 = arith.constant 0 : index
    %18 = vector.load %arg4[%c0_5, %c0_6] : memref<1x128xf32, #tpu.memory_space<vmem>>, vector<1x128xf32>
    %19 = vector.broadcast %18 : vector<1x128xf32> to vector<8x128xf32>
    %20 = arith.mulf %17, %19 : vector<8x128xf32>
    %21 = math.cos %20 : vector<8x128xf32>
    %22 = math.sin %20 : vector<8x128xf32>
    %23 = arith.mulf %12, %22 : vector<8x128xf32>
    %24 = tpu.iota {dimensions = array<i32: 1>} : vector<8x128xi32>
    %c1_i32 = arith.constant 1 : i32
    %25 = vector.broadcast %c1_i32 : i32 to vector<8x128xi32>
    %26 = arith.andi %24, %25 : vector<8x128xi32>
    %c0_i32 = arith.constant 0 : i32
    %27 = vector.broadcast %c0_i32 : i32 to vector<8x128xi32>
    %28 = arith.cmpi eq, %26, %27 : vector<8x128xi32>
    %c127_i32 = arith.constant 127 : i32
    %29 = tpu.dynamic_rotate %23 by %c127_i32 dim 1 : vector<8x128xf32>, i32 -> vector<8x128xf32>
    %c1_i32_7 = arith.constant 1 : i32
    %30 = tpu.dynamic_rotate %23 by %c1_i32_7 dim 1 : vector<8x128xf32>, i32 -> vector<8x128xf32>
    %31 = arith.select %28, %29, %30 : vector<8x128xi1>, vector<8x128xf32>
    %32 = arith.mulf %12, %21 : vector<8x128xf32>
    %33 = arith.addf %32, %31 : vector<8x128xf32>
    %c0_8 = arith.constant 0 : index
    %c0_9 = arith.constant 0 : index
    %c0_10 = arith.constant 0 : index
    %34 = vector.load %arg5[%c0_8, %c0_9, %c0_10] : memref<1x8x128xf32, #tpu.memory_space<vmem>>, vector<1x8x128xf32>
    %35 = vector.shape_cast %34 : vector<1x8x128xf32> to vector<8x128xf32>
    %36 = vector.shape_cast %33 : vector<8x128xf32> to vector<1x8x128xf32>
    tpu.vector_store %arg5[%c0_8, %c0_9, %c0_10], %36 {strides = array<i32>} : memref<1x8x128xf32, #tpu.memory_space<vmem>>, vector<1x8x128xf32>,
    return
  }
  func.func @transform_0(%arg0: i32, %arg1: i32) -> (i32, i32, i32) {
    %c0_i32 = arith.constant 0 : i32
    %c0_i32_0 = arith.constant 0 : i32
    return %arg0, %arg1, %c0_i32 : i32, i32, i32
  }
  func.func @transform_1(%arg0: i32, %arg1: i32) -> (i32, i32) {
    %c0_i32 = arith.constant 0 : i32
    %c0_i32_0 = arith.constant 0 : i32
    %c0_i32_1 = arith.constant 0 : i32
    return %c0_i32, %c0_i32_0 : i32, i32
  }
  func.func @transform_2(%arg0: i32, %arg1: i32) -> (i32, i32) {
    %c0_i32 = arith.constant 0 : i32
    %c0_i32_0 = arith.constant 0 : i32
    %c0_i32_1 = arith.constant 0 : i32
    return %c0_i32, %c0_i32_0 : i32, i32
  }
  func.func @transform_3(%arg0: i32, %arg1: i32) -> (i32, i32, i32) {
    %c0_i32 = arith.constant 0 : i32
    %c0_i32_0 = arith.constant 0 : i32
    return %arg0, %arg1, %c0_i32 : i32, i32, i32
  }
}

</mosaic_0001>

<llo_original>
// kernel: tpu_custom_call.1
$region0: #{tpu_custom_call.1}
  #allocation0 [shape = 'u32[]', space=smem, size = 0x4, offset = 0x4, fixed_abs, tag = 'smem constant byte address 0x4 - core index']
  #allocation1 [shape = 'u32[144,128]{1,0:T(1,128)}', space=vmem, size = 0x12000, scoped, tag = 'internal scratch']
  %s0 = inlined_call_operand.hbm [shape: f32[2,8,128], index: 0, kind: input, shape index: {}]
  %s1 = inlined_call_operand.vmem [shape: f32[1,128], index: 1, kind: input, shape index: {}]
  %s2 = inlined_call_operand.vmem [shape: f32[1,128], index: 2, kind: input, shape index: {}]
  %s3 = inlined_call_operand.hbm [shape: f32[2,8,128], index: 3, kind: output, shape index: {}]
  %s4 = sld [smem:[#allocation0]]
  $region49: #{tpu_custom_call.1} parent=0
    _
  %s6 = ssub.s32 1, %s4
  %s7 = scalar_select 0, %s6, %s4
  $region1: #{tpu_custom_call.1} parent=0
    #allocation2 [shape = 'u8[8192]{0}', space=vmem, size = 0x2000, scoped, tag = 'input window, operand 0']
    #allocation3 [shape = 's32[2]{0}', space=sflag, size = 0x8, scoped, tag = 'scoped memory for tpu_custom_call.1']
    #allocation4 [shape = 's32[2]{0}', space=sflag, size = 0x8, scoped, tag = 'scoped memory for tpu_custom_call.1']
    #allocation5 [shape = 'u8[8192]{0}', space=vmem, size = 0x2000, scoped, tag = 'output window, operand 0']
    %8 = vsyncpa [#allocation3], 0
    %s9 = scalar_lea.sflag [#allocation3], 1
    %10 = vsyncpa %s9, 0
    %11 = vsyncpa [#allocation4], 0
    %s12 = scalar_lea.sflag [#allocation4], 1
    %13 = vsyncpa %s12, 0
    loop: start=0, step=1, limit=4
    $region2: #{tpu_custom_call.1} parent=1 // loop_pre_header
      _
    $region3: #{tpu_custom_call.1} parent=1 // loop_header
      %s15 = sphi 0, %s19
      %p16 = scmp.ge.s32.totalorder %s15, 4
      %s22 = sphi 0, %s34
      %s23 = sphi 0, %s30
      %s24 = sphi 0, %s22
      %s25 = sphi 0, %s23
      %s26 = sphi 0, %s24
      %s27 = sphi 0, %s25
      %s39 = sphi 0, %s41
      %s42 = sphi 0, %s39
      %s43 = sphi 0, %s42
      %s59 = sphi 0, %s43
      %s63 = sphi 0, %s63
      %s65 = sphi 0, %s63
      %s66 = sphi 0, %s65
      %s80 = sphi 0, %s66
      %s84 = sphi 0, %s84
      %s86 = sphi 0, %s84
      %s87 = sphi 0, %s86
      %s101 = sphi 0, %s87
      %s109 = sphi 0, %s111
      %s112 = sphi 0, %s109
      %s113 = sphi 0, %s112
      %s129 = sphi 0, %s113
    $region4: #{tpu_custom_call.1} parent=1 // loop_header_branch
      %18 = sbr.rel (%p16) target = $region8
    $region5: #{tpu_custom_call.1} parent=1 // loop_body
      %s20 = ssub.s32 %s15, 1
      %s21 = ssub.s32 %s15, 2
      %s28 = sadd.s32 1, %s23
      %p29 = scmp.ge.s32.totalorder %s28, 1
      %s30 = scalar_select %p29, 0, %s28
      %s31 = sadd.s32 1, %s22
      %s32 = scalar_select %p29, %s31, %s22
      %p33 = scmp.ge.s32.totalorder %s32, 2
      %s34 = scalar_select %p33, 0, %s32
      %s35 = ssub.s32 %s22, %s34
      %s36 = ssub.s32 %s23, %s30
      %s37 = sor.u32 %s35, %s36
      %p38 = scmp.eq.s32.totalorder %s37, 0
      %s40 = sadd.s32 %s39, 1
      %s41 = scalar_select %p38, %s39, %s40
      %p44 = pneg %p38
      %p45 = scmp.eq.s32.totalorder %s15, 1
      %p46 = por %p44, %p45
      %p47 = scmp.ne.s32.totalorder %s39, %s42
      %p48 = scmp.eq.s32.totalorder %s15, 0
      %p49 = por %p47, %p48
      %p50 = scmp.ne.s32.totalorder %s39, %s42
      %p51 = scmp.eq.s32.totalorder %s20, 1
      %p52 = por %p50, %p51
      %p53 = scmp.ne.s32.totalorder %s42, %s43
      %p54 = scmp.eq.s32.totalorder %s20, 0
      %p55 = por %p53, %p54
      %p56 = scmp.ne.s32.totalorder %s42, %s43
      %p57 = scmp.eq.s32.totalorder %s21, 1
      %p58 = por %p56, %p57
      %p60 = scmp.ne.s32.totalorder %s43, %s59
      %p61 = scmp.eq.s32.totalorder %s21, 0
      %p62 = por %p60, %p61
      %s64 = sadd.s32 %s63, 1
      %p67 = scmp.eq.s32.totalorder %s15, 1
      %p68 = scmp.ne.s32.totalorder %s63, %s65
      %p69 = scmp.eq.s32.totalorder %s15, 0
      %p70 = por %p68, %p69
      %p71 = scmp.ne.s32.totalorder %s63, %s65
      %p72 = scmp.eq.s32.totalorder %s20, 1
      %p73 = por %p71, %p72
      %p74 = scmp.ne.s32.totalorder %s65, %s66
      %p75 = scmp.eq.s32.totalorder %s20, 0
      %p76 = por %p74, %p75
      %p77 = scmp.ne.s32.totalorder %s65, %s66
      %p78 = scmp.eq.s32.totalorder %s21, 1
      %p79 = por %p77, %p78
      %p81 = scmp.ne.s32.totalorder %s66, %s80
      %p82 = scmp.eq.s32.totalorder %s21, 0
      %p83 = por %p81, %p82
      %s85 = sadd.s32 %s84, 1
      %p88 = scmp.eq.s32.totalorder %s15, 1
      %p89 = scmp.ne.s32.totalorder %s84, %s86
      %p90 = scmp.eq.s32.totalorder %s15, 0
      %p91 = por %p89, %p90
      %p92 = scmp.ne.s32.totalorder %s84, %s86
      %p93 = scmp.eq.s32.totalorder %s20, 1
      %p94 = por %p92, %p93
      %p95 = scmp.ne.s32.totalorder %s86, %s87
      %p96 = scmp.eq.s32.totalorder %s20, 0
      %p97 = por %p95, %p96
      %p98 = scmp.ne.s32.totalorder %s86, %s87
      %p99 = scmp.eq.s32.totalorder %s21, 1
      %p100 = por %p98, %p99
      %p102 = scmp.ne.s32.totalorder %s87, %s101
      %p103 = scmp.eq.s32.totalorder %s21, 0
      %p104 = por %p102, %p103
      %s105 = ssub.s32 %s22, %s34
      %s106 = ssub.s32 %s23, %s30
      %s107 = sor.u32 %s105, %s106
      %p108 = scmp.eq.s32.totalorder %s107, 0
      %s110 = sadd.s32 %s109, 1
      %s111 = scalar_select %p108, %s109, %s110
      %p114 = pneg %p108
      %p115 = scmp.eq.s32.totalorder %s15, 1
      %p116 = por %p114, %p115
      %p117 = scmp.ne.s32.totalorder %s109, %s112
      %p118 = scmp.eq.s32.totalorder %s15, 0
      %p119 = por %p117, %p118
      %p120 = scmp.ne.s32.totalorder %s109, %s112
      %p121 = scmp.eq.s32.totalorder %s20, 1
      %p122 = por %p120, %p121
      %p123 = scmp.ne.s32.totalorder %s112, %s113
      %p124 = scmp.eq.s32.totalorder %s20, 0
      %p125 = por %p123, %p124
      %p126 = scmp.ne.s32.totalorder %s112, %s113
      %p127 = scmp.eq.s32.totalorder %s21, 1
      %p128 = por %p126, %p127
      %p130 = scmp.ne.s32.totalorder %s113, %s129
      %p131 = scmp.eq.s32.totalorder %s21, 0
      %p132 = por %p130, %p131
      %p133 = scmp.le.s32.totalorder 1, %s15
      %p134 = scmp.lt.s32.totalorder %s15, 3
      %p135 = pnand %p133, %p134
      %p136 = pneg %p135
      // Predicated region
      $region9: #{tpu_custom_call.1} parent=5 // pred_check
        _
      $region10: #{tpu_custom_call.1} parent=5 // pred_check_branch
        %138 = sbr.rel (%p135) target = $region12
      $region11: #{tpu_custom_call.1} parent=5 // pred_region
        %s139 = ssub.s32 %s15, 1
        // Predicated region
        $region13: #{tpu_custom_call.1} parent=11 // pred_check
          %p140 = pneg %p76
        $region14: #{tpu_custom_call.1} parent=11 // pred_check_branch
          %142 = sbr.rel (%p140) target = $region16
        $region15: #{tpu_custom_call.1} parent=11 // pred_region
          _
        $region16: #{tpu_custom_call.1} parent=11 // pred_fallthru
          _
        // Predicated region
        $region17: #{tpu_custom_call.1} parent=11 // pred_check
          %p143 = pneg %p97
        $region18: #{tpu_custom_call.1} parent=11 // pred_check_branch
          %145 = sbr.rel (%p143) target = $region20
        $region19: #{tpu_custom_call.1} parent=11 // pred_region
          _
        $region20: #{tpu_custom_call.1} parent=11 // pred_fallthru
          _
      $region12: #{tpu_custom_call.1} parent=5 // pred_fallthru
        _
      %p146 = scmp.lt.s32.totalorder %s15, 2
      // Predicated region
      $region21: #{tpu_custom_call.1} parent=5 // pred_check
        %p147 = pneg %p146
      $region22: #{tpu_custom_call.1} parent=5 // pred_check_branch
        %149 = sbr.rel (%p147) target = $region24
      $region23: #{tpu_custom_call.1} parent=5 // pred_region
        // Predicated region
        $region25: #{tpu_custom_call.1} parent=23 // pred_check
          %p150 = pneg %p49
        $region26: #{tpu_custom_call.1} parent=23 // pred_check_branch
          %152 = sbr.rel (%p150) target = $region28
        $region27: #{tpu_custom_call.1} parent=23 // pred_region
          %s153 = sand.u32 %s39, 1
          %s154 = scalar_lea.sflag [#allocation3], %s153
          %s155 = sand.u32 %s39, 1
          %s156 = smul.addr %s155, 8
          %s157 = scalar_lea.vmem [#allocation2], %s156
          %s159 = ssub.s32 128, 128
          %160 = vsyncadd %s154, %s159
          %s161 = sadd.s32 %s23, %s22
          %s162 = smul.addr %s161, 128
          %s163 = scalar_lea.hbm %s0, %s162
          %s165 = sshll.u32 %s157, 4
          %s166 = int_to_ptr.vmem [resolvable:$true] %s165
          %168 = dma.hbm_to_vmem [thread:$0]  %s163, 128, %s166, %s154
        $region28: #{tpu_custom_call.1} parent=23 // pred_fallthru
          _
      $region24: #{tpu_custom_call.1} parent=5 // pred_fallthru
        _
      %p169 = scmp.le.s32.totalorder 1, %s15
      %p170 = scmp.lt.s32.totalorder %s15, 3
      %p171 = pnand %p169, %p170
      %p172 = pneg %p171
      // Predicated region
      $region29: #{tpu_custom_call.1} parent=5 // pred_check
        _
      $region30: #{tpu_custom_call.1} parent=5 // pred_check_branch
        %174 = sbr.rel (%p171) target = $region32
      $region31: #{tpu_custom_call.1} parent=5 // pred_region
        %s175 = ssub.s32 %s15, 1
        %s176 = sand.u32 %s42, 1
        %s177 = scalar_lea.sflag [#allocation3], %s176
        %s178 = sand.u32 %s42, 1
        %s179 = smul.addr %s178, 8
        %s180 = scalar_lea.vmem [#allocation2], %s179
        // Predicated region
        $region33: #{tpu_custom_call.1} parent=31 // pred_check
          %p181 = pneg %p55
        $region34: #{tpu_custom_call.1} parent=31 // pred_check_branch
          %183 = sbr.rel (%p181) target = $region36
        $region35: #{tpu_custom_call.1} parent=31 // pred_region
          %184 = dma.done %s177, 128
        $region36: #{tpu_custom_call.1} parent=31 // pred_fallthru
          _
        %s185 = sand.u32 %s42, 1
        %s186 = scalar_lea.sflag [#allocation3], %s185
        %s187 = sand.u32 %s42, 1
        %s188 = smul.addr %s187, 8
        %s189 = scalar_lea.vmem [#allocation2], %s188
        %p190 = pneg %p55
        %p191 = pneg %p52
        %p192 = pneg %p76
        %p193 = pneg %p73
        %p194 = pneg %p97
        %p195 = pneg %p94
        %p196 = pneg %p125
        %p197 = pneg %p122
        %s198 = sand.u32 %s112, 1
        %s199 = scalar_lea.sflag [#allocation4], %s198
        %s200 = sand.u32 %s112, 1
        %s201 = smul.addr %s200, 8
        %s202 = scalar_lea.vmem [#allocation5], %s201
        %v203 = vld [vmem:[%s180] sm:$0xff]
        %v204 = vld [vmem:[%s1] sm:$0x1]
        %v206 = vlaneseq
        %v207 = vshrl.u32 %v206, 7
        %v208 = vsub.s32 0, %v207
        %v209 = vrot.slane %v204, %v208
        %v211 = vmul.f32 %v203, %v209
        %212 = vadd.xlane.f32.xlu0 %v211
        %v213 = vpop.xlane.xlu0 %212
        %v214 = vmul.f32 %v213, 2.0
        %v215 = vmul.f32 %v214, %v209
        %v216 = vsub.f32 %v203, %v215
        %v217 = vlaneseq
        %v218 = vshrl.u32 %v217, 7
        %s219 = smul.u32 %s25, 8
        %v220 = vstv %s219
        %v221 = vadd.s32 %v218, %v220
        %v222 = vcvt.s32.f32 %v221
        %v223 = vld [vmem:[%s2] sm:$0x1]
        %v225 = vlaneseq
        %v226 = vshrl.u32 %v225, 7
        %v227 = vsub.s32 0, %v226
        %v228 = vrot.slane %v223, %v227
        %v230 = vmul.f32 %v222, %v228
        %v231 = vand.u32 2147483647, %v230
        %vm232 = vcmp.le.f32.partialorder %v231, 0.7853982
        %vm233 = vcmp.lt.s32.totalorder %v230, 0
        %v234 = vand.u32 %v230, 2139095040
        %v235 = vshrl.u32 %v234, 23
        %v236 = vsub.s32 %v235, 127
        %v237 = vand.u32 2147483647, %v230
        %v238 = vand.u32 %v237, 8388607
        %v239 = vor.u32 %v238, 8388608
        %v240 = vsub.s32 0, %v239
        %v241 = vadd.s32 %v236, 1
        %vm242 = vcmp.gt.s32.totalorder %v241, 0
        %v243 = vsel %vm242, %v241, 0
        %v244 = vshrl.u32 %v243, 5
        %v245 = vand.u32 %v243, 31
        %v246 = vsub.s32 32, %v245
        %v247 = vshrl.u32 683565275, %v246
        %v248 = vshll.u32 683565275, %v245
        %v249 = vshrl.u32 2475754826, %v246
        %v250 = vor.u32 %v248, %v249
        %v251 = vshll.u32 2475754826, %v245
        %v252 = vshrl.u32 2131351028, %v246
        %v253 = vor.u32 %v251, %v252
        %v254 = vshll.u32 2131351028, %v245
        %v255 = vshrl.u32 2102212464, %v246
        %v256 = vor.u32 %v254, %v255
        %v257 = vshll.u32 2102212464, %v245
        %v258 = vshrl.u32 920167782, %v246
        %v259 = vor.u32 %v257, %v258
        %v260 = vshll.u32 920167782, %v245
        %v261 = vshrl.u32 1326507024, %v246
        %v262 = vor.u32 %v260, %v261
        %vm263 = vcmp.lt.s32.totalorder %v244, 1
        %vm264 = vcmp.lt.s32.totalorder %v244, 2
        %vm265 = vcmp.lt.s32.totalorder %v244, 3
        %vm266 = vcmp.lt.s32.totalorder %v244, 4
        %v267 = vsel %vm263, %v247, %v250
        %v268 = vsel %vm266, %v256, 2102212464
        %v269 = vsel %vm265, %v253, %v268
        %v270 = vsel %vm264, %v267, %v269
        %v271 = vsel %vm263, %v250, %v253
        %v272 = vsel %vm266, %v259, 920167782
        %v273 = vsel %vm265, %v256, %v272
        %v274 = vsel %vm264, %v271, %v273
        %v275 = vsel %vm263, %v253, %v256
        %v276 = vsel %vm266, %v262, 1326507024
        %v277 = vsel %vm265, %v259, %v276
        %v278 = vsel %vm264, %v275, %v277
        %v279 = vshll.u32 %v239, 8
        %v280 = vmul.u32.u64.compose %v279, %v278
        %v281 = vextract.low.u32 %v280
        %v282 = vextract.high.u32 %v280
        %v283 = vmul.u32.u64.compose %v279, %v274
        %v284 = vextract.low.u32 %v283
        %v285 = vextract.high.u32 %v283
        %v286 = vmul.u32 %v279, %v270
        %v287 = vadd.s32 %v282, %v284
        %vm288 = vc.u32 %v282, %v284
        %v289 = vadd.s32 %v285, 1
        %v290 = vsel %vm288, %v289, %v285
        %v291 = vadd.s32 %v286, %v290
        %v292 = vadd.s32 %v291, 536870912
        %v293 = vshrl.u32 %v292, 30
        %v294 = vshll.u32 %v293, 30
        %v295 = vsub.s32 %v291, %v294
        %vm296 = vcmp.lt.s32.totalorder %v295, 0
        %v297 = vsub.s32 0, %v295
        %v298 = vsel %vm296, %v297, %v295
        %v299 = vclz %v298
        %v300 = vsub.s32 %v299, 2
        %vm301 = vcmp.gt.s32.totalorder 0, %v300
        %v302 = vsel %vm301, 0, %v300
        %v303 = vsub.s32 32, %v302
        %v304 = vshll.u32 %v295, %v302
        %v305 = vshrl.u32 %v287, %v303
        %v306 = vor.u32 %v304, %v305
        %v307 = vsub.s32 4294967266, %v302
        %v308 = vadd.s32 %v307, 127
        %v309 = vshll.u32 %v308, 23
        %v310 = vor.u32 4788187, %v309
        %v311 = vand.u32 2147483647, %v310
        %v313 = vcvt.s32.f32 %v306
        %v314 = vmul.f32 %v313, %v311
        %v315 = vxor.u32 %v314, 2147483648
        %v316 = vsel %vm233, %v315, %v314
        %v317 = vsub.s32 4, %v293
        %v318 = vsel %vm233, %v317, %v293
        %v319 = vsel %vm232, %v230, %v316
        %v320 = vsel %vm232, 0, %v318
        %v321 = vcosq.f32.pop %v319
        %v322 = vsinq.f32.pop %v319
        %vm323 = vweird.f32 %v230
        %v324 = vand.u32 %v320, 3
        %vm325 = vcmp.lt.s32.totalorder %v324, 2
        %vm326 = vcmp.eq.s32.totalorder %v324, 0
        %v327 = vxor.u32 %v322, 2147483648
        %v328 = vsel %vm326, %v321, %v327
        %vm329 = vcmp.eq.s32.totalorder %v324, 2
        %v330 = vxor.u32 %v321, 2147483648
        %v331 = vsel %vm329, %v330, %v322
        %v332 = vsel %vm325, %v328, %v331
        %v333 = vsel %vm323, nan, %v332
        %v334 = vand.u32 2147483647, %v230
        %vm335 = vcmp.le.f32.partialorder %v334, 0.7853982
        %vm336 = vcmp.lt.s32.totalorder %v230, 0
        %v337 = vand.u32 %v230, 2139095040
        %v338 = vshrl.u32 %v337, 23
        %v339 = vsub.s32 %v338, 127
        %v340 = vand.u32 2147483647, %v230
        %v341 = vand.u32 %v340, 8388607
        %v342 = vor.u32 %v341, 8388608
        %v343 = vsub.s32 0, %v342
        %v344 = vadd.s32 %v339, 1
        %vm345 = vcmp.gt.s32.totalorder %v344, 0
        %v346 = vsel %vm345, %v344, 0
        %v347 = vshrl.u32 %v346, 5
        %v348 = vand.u32 %v346, 31
        %v349 = vsub.s32 32, %v348
        %v350 = vshrl.u32 683565275, %v349
        %v351 = vshll.u32 683565275, %v348
        %v352 = vshrl.u32 2475754826, %v349
        %v353 = vor.u32 %v351, %v352
        %v354 = vshll.u32 2475754826, %v348
        %v355 = vshrl.u32 2131351028, %v349
        %v356 = vor.u32 %v354, %v355
        %v357 = vshll.u32 2131351028, %v348
        %v358 = vshrl.u32 2102212464, %v349
        %v359 = vor.u32 %v357, %v358
        %v360 = vshll.u32 2102212464, %v348
        %v361 = vshrl.u32 920167782, %v349
        %v362 = vor.u32 %v360, %v361
        %v363 = vshll.u32 920167782, %v348
        %v364 = vshrl.u32 1326507024, %v349
        %v365 = vor.u32 %v363, %v364
        %vm366 = vcmp.lt.s32.totalorder %v347, 1
        %vm367 = vcmp.lt.s32.totalorder %v347, 2
        %vm368 = vcmp.lt.s32.totalorder %v347, 3
        %vm369 = vcmp.lt.s32.totalorder %v347, 4
        %v370 = vsel %vm366, %v350, %v353
        %v371 = vsel %vm369, %v359, 2102212464
        %v372 = vsel %vm368, %v356, %v371
        %v373 = vsel %vm367, %v370, %v372
        %v374 = vsel %vm366, %v353, %v356
        %v375 = vsel %vm369, %v362, 920167782
        %v376 = vsel %vm368, %v359, %v375
        %v377 = vsel %vm367, %v374, %v376
        %v378 = vsel %vm366, %v356, %v359
        %v379 = vsel %vm369, %v365, 1326507024
        %v380 = vsel %vm368, %v362, %v379
        %v381 = vsel %vm367, %v378, %v380
        %v382 = vshll.u32 %v342, 8
        %v383 = vmul.u32.u64.compose %v382, %v381
        %v384 = vextract.low.u32 %v383
        %v385 = vextract.high.u32 %v383
        %v386 = vmul.u32.u64.compose %v382, %v377
        %v387 = vextract.low.u32 %v386
        %v388 = vextract.high.u32 %v386
        %v389 = vmul.u32 %v382, %v373
        %v390 = vadd.s32 %v385, %v387
        %vm391 = vc.u32 %v385, %v387
        %v392 = vadd.s32 %v388, 1
        %v393 = vsel %vm391, %v392, %v388
        %v394 = vadd.s32 %v389, %v393
        %v395 = vadd.s32 %v394, 536870912
        %v396 = vshrl.u32 %v395, 30
        %v397 = vshll.u32 %v396, 30
        %v398 = vsub.s32 %v394, %v397
        %vm399 = vcmp.lt.s32.totalorder %v398, 0
        %v400 = vsub.s32 0, %v398
        %v401 = vsel %vm399, %v400, %v398
        %v402 = vclz %v401
        %v403 = vsub.s32 %v402, 2
        %vm404 = vcmp.gt.s32.totalorder 0, %v403
        %v405 = vsel %vm404, 0, %v403
        %v406 = vsub.s32 32, %v405
        %v407 = vshll.u32 %v398, %v405
        %v408 = vshrl.u32 %v390, %v406
        %v409 = vor.u32 %v407, %v408
        %v410 = vsub.s32 4294967266, %v405
        %v411 = vadd.s32 %v410, 127
        %v412 = vshll.u32 %v411, 23
        %v413 = vor.u32 4788187, %v412
        %v414 = vand.u32 2147483647, %v413
        %v416 = vcvt.s32.f32 %v409
        %v417 = vmul.f32 %v416, %v414
        %v418 = vxor.u32 %v417, 2147483648
        %v419 = vsel %vm336, %v418, %v417
        %v420 = vsub.s32 4, %v396
        %v421 = vsel %vm336, %v420, %v396
        %v422 = vsel %vm335, %v230, %v419
        %v423 = vsel %vm335, 0, %v421
        %v424 = vcosq.f32.pop %v422
        %v425 = vsinq.f32.pop %v422
        %vm426 = vweird.f32 %v230
        %v427 = vadd.s32 %v423, 3
        %v428 = vand.u32 %v427, 3
        %vm429 = vcmp.lt.s32.totalorder %v428, 2
        %vm430 = vcmp.eq.s32.totalorder %v428, 0
        %v431 = vxor.u32 %v425, 2147483648
        %v432 = vsel %vm430, %v424, %v431
        %vm433 = vcmp.eq.s32.totalorder %v428, 2
        %v434 = vxor.u32 %v424, 2147483648
        %v435 = vsel %vm433, %v434, %v425
        %v436 = vsel %vm429, %v432, %v435
        %v437 = vsel %vm426, nan, %v436
        %v438 = vmul.f32 %v216, %v437
        %v439 = vlaneseq
        %v440 = vand.u32 %v439, 127
        %v441 = vand.u32 %v440, 1
        %vm442 = vcmp.eq.s32.totalorder %v441, 0
        %443 = vrot.lane.b32.xlu0 %v438, 127
        %v444 = vpop.permute.xlu0 %443
        %445 = vrot.lane.b32.xlu0 %v438, 1
        %v446 = vpop.permute.xlu0 %445
        %v447 = vsel %vm442, %v444, %v446
        %v448 = vmul.f32 %v216, %v333
        %v449 = vadd.f32 %v448, %v447
        %450 = vst [vmem:[%s202] sm:$0xff] %v449
        %s451 = sand.u32 %s112, 1
        %s452 = scalar_lea.sflag [#allocation4], %s451
        %s453 = sand.u32 %s112, 1
        %s454 = smul.addr %s453, 8
        %s455 = scalar_lea.vmem [#allocation5], %s454
        // Predicated region
        $region37: #{tpu_custom_call.1} parent=31 // pred_check
          %p456 = pneg %p122
        $region38: #{tpu_custom_call.1} parent=31 // pred_check_branch
          %458 = sbr.rel (%p456) target = $region40
        $region39: #{tpu_custom_call.1} parent=31 // pred_region
          %s460 = ssub.s32 128, 128
          %461 = vsyncadd %s452, %s460
          %s462 = sadd.s32 %s25, %s24
          %s463 = smul.addr %s462, 128
          %s464 = scalar_lea.hbm %s3, %s463
          %s466 = sshll.u32 %s455, 4
          %s467 = int_to_ptr.vmem [resolvable:$true] %s466
          %469 = dma.vmem_to_hbm [thread:$0]  %s467, 128, %s464, %s452
        $region40: #{tpu_custom_call.1} parent=31 // pred_fallthru
          _
      $region32: #{tpu_custom_call.1} parent=5 // pred_fallthru
        _
      %p470 = scmp.le.s32.totalorder 2, %s15
      // Predicated region
      $region41: #{tpu_custom_call.1} parent=5 // pred_check
        %p471 = pneg %p470
      $region42: #{tpu_custom_call.1} parent=5 // pred_check_branch
        %473 = sbr.rel (%p471) target = $region44
      $region43: #{tpu_custom_call.1} parent=5 // pred_region
        %s474 = ssub.s32 %s15, 2
        // Predicated region
        $region45: #{tpu_custom_call.1} parent=43 // pred_check
          %p475 = pneg %p128
        $region46: #{tpu_custom_call.1} parent=43 // pred_check_branch
          %477 = sbr.rel (%p475) target = $region48
        $region47: #{tpu_custom_call.1} parent=43 // pred_region
          %s478 = sand.u32 %s113, 1
          %s479 = scalar_lea.sflag [#allocation4], %s478
          %s480 = sand.u32 %s113, 1
          %s481 = smul.addr %s480, 8
          %s482 = scalar_lea.vmem [#allocation5], %s481
          %483 = dma.done %s479, 128
        $region48: #{tpu_custom_call.1} parent=43 // pred_fallthru
          _
      $region44: #{tpu_custom_call.1} parent=5 // pred_fallthru
        _
    $region6: #{tpu_custom_call.1} parent=1 // loop_footer
      %s19 = sadd.s32 1, %s15
    $region7: #{tpu_custom_call.1} parent=1 // loop_footer_branch
      %14 = sbr.rel target = $region3
    $region8: #{tpu_custom_call.1} parent=1 // loop_exit
      _
    %484 = vsyncpa [#allocation3], 1
    %s485 = scalar_lea.sflag [#allocation3], 1
    %486 = vsyncpa %s485, 1
    %487 = vsyncpa [#allocation4], 1
    %s488 = scalar_lea.sflag [#allocation4], 1
    %489 = vsyncpa %s488, 1

</llo_original>
